<compile_context>
chip_gen: v6e
topology: v6e:2x2x1
jax: 0.10.0
libtpu: 0.0.40
codegen_flags: <defaults>
</compile_context>

<pallas_src>
import functools

import jax
import jax.numpy as jnp
from jax.experimental import pallas as pl
from jax.experimental.pallas import tpu as pltpu


def _gbn_kernel(x_ref, w_ref, b_ref, o_ref, *, eps):
    # x_ref: (B, Cg, HW)   w_ref / b_ref: (B, Cg, 1)
    x = x_ref[...].astype(jnp.float32)
    n_elem = x.shape[1] * x.shape[2]
    inv_n = 1.0 / n_elem

    # Per-row (per (n,g) pair) statistics, f32 accumulation, single pass.
    s1 = jnp.sum(jnp.sum(x, axis=2, keepdims=True), axis=1, keepdims=True)       # (B,1,1)
    s2 = jnp.sum(jnp.sum(x * x, axis=2, keepdims=True), axis=1, keepdims=True)   # (B,1,1)
    mean = s1 * inv_n
    var = jnp.maximum(s2 * inv_n - mean * mean, 0.0)      # biased variance
    inv = jax.lax.rsqrt(var + eps)                        # (B,1,1)

    w = w_ref[...].astype(jnp.float32)                    # (B,Cg,1)
    b = b_ref[...].astype(jnp.float32)
    scale = w * inv                                       # (B,Cg,1)
    shift = b - mean * scale                              # (B,Cg,1)

    # Single fused multiply-add per element.
    o_ref[...] = (x * scale + shift).astype(o_ref.dtype)


def _pick_block_rows(rows, group, row_bytes, target_bytes):
    """Choose B rows per grid step.

    B must divide rows = N*G and be either a multiple of G or a divisor of G so
    the affine slab can be indexed without dynamic gathers. Prefer the largest
    B whose tile fits the byte budget; prefer >= 2 grid steps (v7x megacore).
    """
    n = rows // group
    cands = set()
    for d in range(1, n + 1):          # multiples of G that divide rows
        if n % d == 0:
            cands.add(d * group)
    for d in range(1, group + 1):      # divisors of G
        if group % d == 0:
            cands.add(d)
    cands = sorted(cands)
    fits = [b for b in cands if b * row_bytes <= target_bytes] or [cands[0]]
    multi = [b for b in fits if rows // b >= 2]
    return multi[-1] if multi else fits[-1]


def group_batch_norm(x, weight, bias, *, group, eps=1e-5,
                     target_block_bytes=2 * 1024 * 1024):
    N, C, H, W = x.shape
    G = group
    assert C % G == 0
    Cg = C // G
    HW = H * W
    rows = N * G

    if weight is None:
        weight = jnp.ones((C,), x.dtype)
    if bias is None:
        bias = jnp.zeros((C,), x.dtype)

    # rows = (n,g) pairs; sublane = within-group channel; lane = flattened H*W.
    x_r = x.reshape(rows, Cg, HW)

    row_bytes = Cg * HW * x.dtype.itemsize
    B = _pick_block_rows(rows, G, row_bytes, target_block_bytes)

    # Affine slab: only a tiny (B or G, Cg, 1) array — never tiled over N.
    if B % G == 0:
        w_arr = jnp.tile(weight.reshape(G, Cg), (B // G, 1)).reshape(B, Cg, 1)
        b_arr = jnp.tile(bias.reshape(G, Cg), (B // G, 1)).reshape(B, Cg, 1)
        wb_map = lambda i: (0, 0, 0)                      # resident across grid
    else:  # B divides G: pick the matching contiguous slice of (G, Cg)
        w_arr = weight.reshape(G, Cg, 1)
        b_arr = bias.reshape(G, Cg, 1)
        nblk = G // B
        wb_map = lambda i: (i % nblk, 0, 0)

    grid = (rows // B,)

    out = pl.pallas_call(
        functools.partial(_gbn_kernel, eps=float(eps)),
        out_shape=jax.ShapeDtypeStruct((rows, Cg, HW), x.dtype),
        grid_spec=pltpu.PrefetchScalarGridSpec(
            num_scalar_prefetch=0,
            grid=grid,
            in_specs=[
                pl.BlockSpec((B, Cg, HW), lambda i: (i, 0, 0)),
                pl.BlockSpec((B, Cg, 1), wb_map),
                pl.BlockSpec((B, Cg, 1), wb_map),
            ],
            out_specs=pl.BlockSpec((B, Cg, HW), lambda i: (i, 0, 0)),
        ),
        compiler_params=pltpu.CompilerParams(
            dimension_semantics=("parallel",),
            vmem_limit_bytes=48 * 1024 * 1024,   # safe on v5e/v6e (128 MiB) and v7x (64 MiB)
        ),
    )(x_r, w_arr, b_arr)

    return out.reshape(N, C, H, W)


def _reference(x, weight, bias, *, group, eps=1e-5):
    N, C, H, W = x.shape
    Cg = C // group
    xr = x.reshape(N, group, Cg * H * W).astype(jnp.float32)
    mean = jnp.mean(xr, axis=-1, keepdims=True)
    var = jnp.mean((xr - mean) ** 2, axis=-1, keepdims=True)
    xn = ((xr - mean) / jnp.sqrt(var + eps)).reshape(N, C, H, W)
    return xn * weight.reshape(1, C, 1, 1) + bias.reshape(1, C, 1, 1)


if __name__ == "__main__":
    key = jax.random.PRNGKey(0)
    kx, kw = jax.random.split(key)

    N, C, H, W = 2, 4, 16, 16
    group = 2
    eps = 1e-5

    x = jax.random.normal(kx, (N, C, H, W), dtype=jnp.float32)
    # reset_parameters(): weight ~ U[0,1), bias = 0
    weight = jax.random.uniform(kw, (C,), dtype=jnp.float32)
    bias = jnp.zeros((C,), dtype=jnp.float32)

    y = group_batch_norm(x, weight, bias, group=group, eps=eps)
    y = jax.block_until_ready(y)

    y_ref = _reference(x, weight, bias, group=group, eps=eps)
    assert jnp.allclose(y, y_ref, atol=1e-4, rtol=1e-4), "mismatch vs reference"

    print("KERNEL_OK")
</pallas_src>

<mosaic_0001>
module attributes {stable_mosaic.version = 11 : i64} {
  func.func @_gbn_kernel(%arg0: i32, %arg1: memref<2x2x256xf32, #tpu.memory_space<vmem>>, %arg2: memref<2x2x1xf32, #tpu.memory_space<vmem>>, %arg3: memref<2x2x1xf32, #tpu.memory_space<vmem>>, %arg4: memref<2x2x256xf32, #tpu.memory_space<vmem>>) attributes {dimension_semantics = [#tpu.dimension_semantics<parallel>], iteration_bounds = array<i64: 2>, scalar_prefetch = 0 : i64, scratch_operands = 0 : i64, tpu.core_type = #tpu.core_type<tc>, window_params = [{transform_indices = @transform_0, window_bounds = array<i64: 2, 2, 256>}, {pipeline_mode = #tpu.pipeline_mode<synchronous>, transform_indices = @transform_1, window_bounds = array<i64: 2, 2, 1>}, {pipeline_mode = #tpu.pipeline_mode<synchronous>, transform_indices = @transform_2, window_bounds = array<i64: 2, 2, 1>}, {transform_indices = @transform_3, window_bounds = array<i64: 2, 2, 256>}]} {
    %c0 = arith.constant 0 : index
    %c0_0 = arith.constant 0 : index
    %c0_1 = arith.constant 0 : index
    %0 = vector.load %arg1[%c0, %c0_0, %c0_1] : memref<2x2x256xf32, #tpu.memory_space<vmem>>, vector<2x2x256xf32>
    %cst = arith.constant dense<0.000000e+00> : vector<2x2xf32>
    %1 = vector.multi_reduction <add>, %0, %cst [2] : vector<2x2x256xf32> to vector<2x2xf32>
    %2 = vector.shape_cast %1 : vector<2x2xf32> to vector<2x2x1xf32>
    %cst_2 = arith.constant dense<0.000000e+00> : vector<2x1xf32>
    %3 = vector.multi_reduction <add>, %2, %cst_2 [1] : vector<2x2x1xf32> to vector<2x1xf32>
    %4 = vector.shape_cast %3 : vector<2x1xf32> to vector<2x1x1xf32>
    %5 = arith.mulf %0, %0 : vector<2x2x256xf32>
    %cst_3 = arith.constant dense<0.000000e+00> : vector<2x2xf32>
    %6 = vector.multi_reduction <add>, %5, %cst_3 [2] : vector<2x2x256xf32> to vector<2x2xf32>
    %7 = vector.shape_cast %6 : vector<2x2xf32> to vector<2x2x1xf32>
    %cst_4 = arith.constant dense<0.000000e+00> : vector<2x1xf32>
    %8 = vector.multi_reduction <add>, %7, %cst_4 [1] : vector<2x2x1xf32> to vector<2x1xf32>
    %9 = vector.shape_cast %8 : vector<2x1xf32> to vector<2x1x1xf32>
    %cst_5 = arith.constant 0.001953125 : f32
    %10 = vector.broadcast %cst_5 : f32 to vector<2x1x1xf32>
    %11 = arith.mulf %4, %10 : vector<2x1x1xf32>
    %cst_6 = arith.constant 0.001953125 : f32
    %12 = vector.broadcast %cst_6 : f32 to vector<2x1x1xf32>
    %13 = arith.mulf %9, %12 : vector<2x1x1xf32>
    %14 = arith.mulf %11, %11 : vector<2x1x1xf32>
    %15 = arith.subf %13, %14 : vector<2x1x1xf32>
    %cst_7 = arith.constant 0.000000e+00 : f32
    %16 = vector.broadcast %cst_7 : f32 to vector<2x1x1xf32>
    %17 = arith.maximumf %15, %16 : vector<2x1x1xf32>
    %cst_8 = arith.constant 9.99999974E-6 : f32
    %18 = vector.broadcast %cst_8 : f32 to vector<2x1x1xf32>
    %19 = arith.addf %17, %18 : vector<2x1x1xf32>
    %20 = math.rsqrt %19 : vector<2x1x1xf32>
    %c0_9 = arith.constant 0 : index
    %c0_10 = arith.constant 0 : index
    %c0_11 = arith.constant 0 : index
    %21 = vector.load %arg2[%c0_9, %c0_10, %c0_11] : memref<2x2x1xf32, #tpu.memory_space<vmem>>, vector<2x2x1xf32>
    %c0_12 = arith.constant 0 : index
    %c0_13 = arith.constant 0 : index
    %c0_14 = arith.constant 0 : index
    %22 = vector.load %arg3[%c0_12, %c0_13, %c0_14] : memref<2x2x1xf32, #tpu.memory_space<vmem>>, vector<2x2x1xf32>
    %23 = vector.broadcast %20 : vector<2x1x1xf32> to vector<2x2x1xf32>
    %24 = arith.mulf %21, %23 : vector<2x2x1xf32>
    %25 = vector.broadcast %11 : vector<2x1x1xf32> to vector<2x2x1xf32>
    %26 = arith.mulf %25, %24 : vector<2x2x1xf32>
    %27 = arith.subf %22, %26 : vector<2x2x1xf32>
    %28 = vector.broadcast %24 : vector<2x2x1xf32> to vector<2x2x256xf32>
    %29 = arith.mulf %0, %28 : vector<2x2x256xf32>
    %30 = vector.broadcast %27 : vector<2x2x1xf32> to vector<2x2x256xf32>
    %31 = arith.addf %29, %30 : vector<2x2x256xf32>
    %c0_15 = arith.constant 0 : index
    %c0_16 = arith.constant 0 : index
    %c0_17 = arith.constant 0 : index
    %32 = vector.load %arg4[%c0_15, %c0_16, %c0_17] : memref<2x2x256xf32, #tpu.memory_space<vmem>>, vector<2x2x256xf32>
    tpu.vector_store %arg4[%c0_15, %c0_16, %c0_17], %31 {strides = array<i32>} : memref<2x2x256xf32, #tpu.memory_space<vmem>>, vector<2x2x256xf32>,
    return
  }
  func.func @transform_0(%arg0: i32) -> (i32, i32, i32) {
    %c0_i32 = arith.constant 0 : i32
    %c0_i32_0 = arith.constant 0 : i32
    %c0_i32_1 = arith.constant 0 : i32
    return %arg0, %c0_i32, %c0_i32_0 : i32, i32, i32
  }
  func.func @transform_1(%arg0: i32) -> (i32, i32, i32) {
    %c0_i32 = arith.constant 0 : i32
    %c0_i32_0 = arith.constant 0 : i32
    %c0_i32_1 = arith.constant 0 : i32
    %c0_i32_2 = arith.constant 0 : i32
    return %c0_i32, %c0_i32_0, %c0_i32_1 : i32, i32, i32
  }
  func.func @transform_2(%arg0: i32) -> (i32, i32, i32) {
    %c0_i32 = arith.constant 0 : i32
    %c0_i32_0 = arith.constant 0 : i32
    %c0_i32_1 = arith.constant 0 : i32
    %c0_i32_2 = arith.constant 0 : i32
    return %c0_i32, %c0_i32_0, %c0_i32_1 : i32, i32, i32
  }
  func.func @transform_3(%arg0: i32) -> (i32, i32, i32) {
    %c0_i32 = arith.constant 0 : i32
    %c0_i32_0 = arith.constant 0 : i32
    %c0_i32_1 = arith.constant 0 : i32
    return %arg0, %c0_i32, %c0_i32_0 : i32, i32, i32
  }
}

</mosaic_0001>

<llo_original>
// kernel: tpu_custom_call.1
$region0: #{tpu_custom_call.1}
  #allocation0 [shape = 'u32[]', space=smem, size = 0x4, offset = 0x4, fixed_abs, tag = 'smem constant byte address 0x4 - core index']
  #allocation1 [shape = 'u32[144,128]{1,0:T(1,128)}', space=vmem, size = 0x12000, scoped, tag = 'internal scratch']
  %s0 = inlined_call_operand.hbm [shape: f32[4,2,256], index: 0, kind: input, shape index: {}]
  %s1 = inlined_call_operand.vmem [shape: f32[2,2,1], index: 1, kind: input, shape index: {}]
  %s2 = inlined_call_operand.vmem [shape: f32[2,2,1], index: 2, kind: input, shape index: {}]
  %s3 = inlined_call_operand.hbm [shape: f32[4,2,256], index: 3, kind: output, shape index: {}]
  %s4 = sld [smem:[#allocation0]]
  $region49: #{tpu_custom_call.1} parent=0
    _
  %s6 = ssub.s32 1, %s4
  %s7 = scalar_select 0, %s6, %s4
  $region1: #{tpu_custom_call.1} parent=0
    #allocation2 [shape = 'u8[8192]{0}', space=vmem, size = 0x2000, scoped, tag = 'input window, operand 0']
    #allocation3 [shape = 's32[2]{0}', space=sflag, size = 0x8, scoped, tag = 'scoped memory for tpu_custom_call.1']
    #allocation4 [shape = 's32[2]{0}', space=sflag, size = 0x8, scoped, tag = 'scoped memory for tpu_custom_call.1']
    #allocation5 [shape = 'u8[8192]{0}', space=vmem, size = 0x2000, scoped, tag = 'output window, operand 0']
    %8 = vsyncpa [#allocation3], 0
    %s9 = scalar_lea.sflag [#allocation3], 1
    %10 = vsyncpa %s9, 0
    %11 = vsyncpa [#allocation4], 0
    %s12 = scalar_lea.sflag [#allocation4], 1
    %13 = vsyncpa %s12, 0
    loop: start=0, step=1, limit=4
    $region2: #{tpu_custom_call.1} parent=1 // loop_pre_header
      _
    $region3: #{tpu_custom_call.1} parent=1 // loop_header
      %s15 = sphi 0, %s19
      %p16 = scmp.ge.s32.totalorder %s15, 4
      %s25 = sphi 0, %s27
      %s28 = sphi 0, %s25
      %s29 = sphi 0, %s28
      %s45 = sphi 0, %s29
      %s49 = sphi 0, %s49
      %s51 = sphi 0, %s49
      %s52 = sphi 0, %s51
      %s66 = sphi 0, %s52
      %s70 = sphi 0, %s70
      %s72 = sphi 0, %s70
      %s73 = sphi 0, %s72
      %s87 = sphi 0, %s73
      %s93 = sphi 0, %s95
      %s96 = sphi 0, %s93
      %s97 = sphi 0, %s96
      %s113 = sphi 0, %s97
    $region4: #{tpu_custom_call.1} parent=1 // loop_header_branch
      %18 = sbr.rel (%p16) target = $region8
    $region5: #{tpu_custom_call.1} parent=1 // loop_body
      %s20 = ssub.s32 %s15, 1
      %s21 = ssub.s32 %s15, 2
      %s22 = sadd.s32 %s15, 1
      %s23 = ssub.s32 %s15, %s22
      %p24 = scmp.eq.s32.totalorder %s23, 0
      %s26 = sadd.s32 %s25, 1
      %s27 = scalar_select %p24, %s25, %s26
      %p30 = pneg %p24
      %p31 = scmp.eq.s32.totalorder %s15, 1
      %p32 = por %p30, %p31
      %p33 = scmp.ne.s32.totalorder %s25, %s28
      %p34 = scmp.eq.s32.totalorder %s15, 0
      %p35 = por %p33, %p34
      %p36 = scmp.ne.s32.totalorder %s25, %s28
      %p37 = scmp.eq.s32.totalorder %s20, 1
      %p38 = por %p36, %p37
      %p39 = scmp.ne.s32.totalorder %s28, %s29
      %p40 = scmp.eq.s32.totalorder %s20, 0
      %p41 = por %p39, %p40
      %p42 = scmp.ne.s32.totalorder %s28, %s29
      %p43 = scmp.eq.s32.totalorder %s21, 1
      %p44 = por %p42, %p43
      %p46 = scmp.ne.s32.totalorder %s29, %s45
      %p47 = scmp.eq.s32.totalorder %s21, 0
      %p48 = por %p46, %p47
      %s50 = sadd.s32 %s49, 1
      %p53 = scmp.eq.s32.totalorder %s15, 1
      %p54 = scmp.ne.s32.totalorder %s49, %s51
      %p55 = scmp.eq.s32.totalorder %s15, 0
      %p56 = por %p54, %p55
      %p57 = scmp.ne.s32.totalorder %s49, %s51
      %p58 = scmp.eq.s32.totalorder %s20, 1
      %p59 = por %p57, %p58
      %p60 = scmp.ne.s32.totalorder %s51, %s52
      %p61 = scmp.eq.s32.totalorder %s20, 0
      %p62 = por %p60, %p61
      %p63 = scmp.ne.s32.totalorder %s51, %s52
      %p64 = scmp.eq.s32.totalorder %s21, 1
      %p65 = por %p63, %p64
      %p67 = scmp.ne.s32.totalorder %s52, %s66
      %p68 = scmp.eq.s32.totalorder %s21, 0
      %p69 = por %p67, %p68
      %s71 = sadd.s32 %s70, 1
      %p74 = scmp.eq.s32.totalorder %s15, 1
      %p75 = scmp.ne.s32.totalorder %s70, %s72
      %p76 = scmp.eq.s32.totalorder %s15, 0
      %p77 = por %p75, %p76
      %p78 = scmp.ne.s32.totalorder %s70, %s72
      %p79 = scmp.eq.s32.totalorder %s20, 1
      %p80 = por %p78, %p79
      %p81 = scmp.ne.s32.totalorder %s72, %s73
      %p82 = scmp.eq.s32.totalorder %s20, 0
      %p83 = por %p81, %p82
      %p84 = scmp.ne.s32.totalorder %s72, %s73
      %p85 = scmp.eq.s32.totalorder %s21, 1
      %p86 = por %p84, %p85
      %p88 = scmp.ne.s32.totalorder %s73, %s87
      %p89 = scmp.eq.s32.totalorder %s21, 0
      %p90 = por %p88, %p89
      %s91 = ssub.s32 %s15, %s22
      %p92 = scmp.eq.s32.totalorder %s91, 0
      %s94 = sadd.s32 %s93, 1
      %s95 = scalar_select %p92, %s93, %s94
      %p98 = pneg %p92
      %p99 = scmp.eq.s32.totalorder %s15, 1
      %p100 = por %p98, %p99
      %p101 = scmp.ne.s32.totalorder %s93, %s96
      %p102 = scmp.eq.s32.totalorder %s15, 0
      %p103 = por %p101, %p102
      %p104 = scmp.ne.s32.totalorder %s93, %s96
      %p105 = scmp.eq.s32.totalorder %s20, 1
      %p106 = por %p104, %p105
      %p107 = scmp.ne.s32.totalorder %s96, %s97
      %p108 = scmp.eq.s32.totalorder %s20, 0
      %p109 = por %p107, %p108
      %p110 = scmp.ne.s32.totalorder %s96, %s97
      %p111 = scmp.eq.s32.totalorder %s21, 1
      %p112 = por %p110, %p111
      %p114 = scmp.ne.s32.totalorder %s97, %s113
      %p115 = scmp.eq.s32.totalorder %s21, 0
      %p116 = por %p114, %p115
      %p117 = scmp.le.s32.totalorder 1, %s15
      %p118 = scmp.lt.s32.totalorder %s15, 3
      %p119 = pnand %p117, %p118
      %p120 = pneg %p119
      // Predicated region
      $region9: #{tpu_custom_call.1} parent=5 // pred_check
        _
      $region10: #{tpu_custom_call.1} parent=5 // pred_check_branch
        %122 = sbr.rel (%p119) target = $region12
      $region11: #{tpu_custom_call.1} parent=5 // pred_region
        %s123 = ssub.s32 %s15, 1
        // Predicated region
        $region13: #{tpu_custom_call.1} parent=11 // pred_check
          %p124 = pneg %p62
        $region14: #{tpu_custom_call.1} parent=11 // pred_check_branch
          %126 = sbr.rel (%p124) target = $region16
        $region15: #{tpu_custom_call.1} parent=11 // pred_region
          _
        $region16: #{tpu_custom_call.1} parent=11 // pred_fallthru
          _
        // Predicated region
        $region17: #{tpu_custom_call.1} parent=11 // pred_check
          %p127 = pneg %p83
        $region18: #{tpu_custom_call.1} parent=11 // pred_check_branch
          %129 = sbr.rel (%p127) target = $region20
        $region19: #{tpu_custom_call.1} parent=11 // pred_region
          _
        $region20: #{tpu_custom_call.1} parent=11 // pred_fallthru
          _
      $region12: #{tpu_custom_call.1} parent=5 // pred_fallthru
        _
      %p130 = scmp.lt.s32.totalorder %s15, 2
      // Predicated region
      $region21: #{tpu_custom_call.1} parent=5 // pred_check
        %p131 = pneg %p130
      $region22: #{tpu_custom_call.1} parent=5 // pred_check_branch
        %133 = sbr.rel (%p131) target = $region24
      $region23: #{tpu_custom_call.1} parent=5 // pred_region
        // Predicated region
        $region25: #{tpu_custom_call.1} parent=23 // pred_check
          %p134 = pneg %p35
        $region26: #{tpu_custom_call.1} parent=23 // pred_check_branch
          %136 = sbr.rel (%p134) target = $region28
        $region27: #{tpu_custom_call.1} parent=23 // pred_region
          %s137 = sand.u32 %s25, 1
          %s138 = scalar_lea.sflag [#allocation3], %s137
          %s139 = sand.u32 %s25, 1
          %s140 = smul.addr %s139, 8
          %s141 = scalar_lea.vmem [#allocation2], %s140
          %s142 = smul.u32 2, %s15
          %s144 = ssub.s32 128, 128
          %145 = vsyncadd %s138, %s144
          %s146 = smul.addr %s142, 2
          %s147 = smul.addr %s146, 32
          %s148 = scalar_lea.hbm %s0, %s147
          %s149 = sshll.u32 %s141, 4
          %s150 = int_to_ptr.vmem [resolvable:$true] %s149
          %155 = dma.hbm_to_vmem [thread:$0]  %s148, 128, %s150, %s138, 64, 64, 4
        $region28: #{tpu_custom_call.1} parent=23 // pred_fallthru
          _
      $region24: #{tpu_custom_call.1} parent=5 // pred_fallthru
        _
      %p156 = scmp.le.s32.totalorder 1, %s15
      %p157 = scmp.lt.s32.totalorder %s15, 3
      %p158 = pnand %p156, %p157
      %p159 = pneg %p158
      // Predicated region
      $region29: #{tpu_custom_call.1} parent=5 // pred_check
        _
      $region30: #{tpu_custom_call.1} parent=5 // pred_check_branch
        %161 = sbr.rel (%p158) target = $region32
      $region31: #{tpu_custom_call.1} parent=5 // pred_region
        %s162 = ssub.s32 %s15, 1
        %s163 = sand.u32 %s28, 1
        %s164 = scalar_lea.sflag [#allocation3], %s163
        %s165 = sand.u32 %s28, 1
        %s166 = smul.addr %s165, 8
        %s167 = scalar_lea.vmem [#allocation2], %s166
        // Predicated region
        $region33: #{tpu_custom_call.1} parent=31 // pred_check
          %p168 = pneg %p41
        $region34: #{tpu_custom_call.1} parent=31 // pred_check_branch
          %170 = sbr.rel (%p168) target = $region36
        $region35: #{tpu_custom_call.1} parent=31 // pred_region
          %171 = dma.done %s164, 128
        $region36: #{tpu_custom_call.1} parent=31 // pred_fallthru
          _
        %s172 = sand.u32 %s28, 1
        %s173 = scalar_lea.sflag [#allocation3], %s172
        %s174 = sand.u32 %s28, 1
        %s175 = smul.addr %s174, 8
        %s176 = scalar_lea.vmem [#allocation2], %s175
        %p177 = pneg %p41
        %p178 = pneg %p38
        %p179 = pneg %p62
        %p180 = pneg %p59
        %p181 = pneg %p83
        %p182 = pneg %p80
        %p183 = pneg %p109
        %p184 = pneg %p106
        %s185 = sand.u32 %s96, 1
        %s186 = scalar_lea.sflag [#allocation4], %s185
        %s187 = sand.u32 %s96, 1
        %s188 = smul.addr %s187, 8
        %s189 = scalar_lea.vmem [#allocation5], %s188
        %s190 = smul.u32 2, %s20
        %s191 = smul.u32 2, %s20
        %v192 = vld [vmem:[%s167] sm:$0xf]
        %v193 = vld [vmem:[%s167 + $0x4] sm:$0xf]
        %v197 = vunpack.c.l.s4 1983009808
        %v198 = vunpack.c.0.s8 %v197
        %v199 = vlaneseq
        %v200 = vshrl.u32 %v199, 7
        %v201 = vsub.s32 %v198, %v200
        %v202 = vrot.slane %v192, %v201
        %v203 = vcombine.high %v202, %v202
        %v205 = vunpack.c.l.s4 1983009808
        %v206 = vunpack.c.0.s8 %v205
        %v207 = vlaneseq
        %v208 = vshrl.u32 %v207, 7
        %v209 = vsub.s32 %v206, %v208
        %v210 = vrot.slane %v193, %v209
        %v211 = vcombine.high %v210, %v210
        %vm216 = vcmask 1041408
        %v217 = vsel %vm216, %v202, 0.0
        %v218 = vsel %vm216, %v203, 0.0
        %v219 = vadd.f32 %v217, %v218
        %220 = vadd.xlane.f32.xlu0 %v219
        %v221 = vpop.xlane.xlu0 %220
        %v222 = vsel %vm216, %v210, 0.0
        %v223 = vsel %vm216, %v211, 0.0
        %v224 = vadd.f32 %v222, %v223
        %225 = vadd.xlane.f32.xlu0 %v224
        %v226 = vpop.xlane.xlu0 %225
        %v227 = vsel %vm216, %v221, 0.0
        %v228 = vrot.slane %v227, 4
        %v229 = vadd.f32 %v227, %v228
        %v230 = vrot.slane %v229, 2
        %v231 = vadd.f32 %v229, %v230
        %v232 = vrot.slane %v231, 1
        %v233 = vadd.f32 %v231, %v232
        %v234 = vsel %vm216, %v226, 0.0
        %v235 = vrot.slane %v234, 4
        %v236 = vadd.f32 %v234, %v235
        %v237 = vrot.slane %v236, 2
        %v238 = vadd.f32 %v236, %v237
        %v239 = vrot.slane %v238, 1
        %v240 = vadd.f32 %v238, %v239
        %v241 = vmul.f32 %v192, %v192
        %v242 = vmul.f32 %v193, %v193
        %v246 = vunpack.c.l.s4 1983009808
        %v247 = vunpack.c.0.s8 %v246
        %v248 = vlaneseq
        %v249 = vshrl.u32 %v248, 7
        %v250 = vsub.s32 %v247, %v249
        %v251 = vrot.slane %v241, %v250
        %v252 = vcombine.high %v251, %v251
        %v254 = vunpack.c.l.s4 1983009808
        %v255 = vunpack.c.0.s8 %v254
        %v256 = vlaneseq
        %v257 = vshrl.u32 %v256, 7
        %v258 = vsub.s32 %v255, %v257
        %v259 = vrot.slane %v242, %v258
        %v260 = vcombine.high %v259, %v259
        %v265 = vsel %vm216, %v251, 0.0
        %v266 = vsel %vm216, %v252, 0.0
        %v267 = vadd.f32 %v265, %v266
        %268 = vadd.xlane.f32.xlu0 %v267
        %v269 = vpop.xlane.xlu0 %268
        %v270 = vsel %vm216, %v259, 0.0
        %v271 = vsel %vm216, %v260, 0.0
        %v272 = vadd.f32 %v270, %v271
        %273 = vadd.xlane.f32.xlu0 %v272
        %v274 = vpop.xlane.xlu0 %273
        %v275 = vsel %vm216, %v269, 0.0
        %v276 = vrot.slane %v275, 4
        %v277 = vadd.f32 %v275, %v276
        %v278 = vrot.slane %v277, 2
        %v279 = vadd.f32 %v277, %v278
        %v280 = vrot.slane %v279, 1
        %v281 = vadd.f32 %v279, %v280
        %v282 = vsel %vm216, %v274, 0.0
        %v283 = vrot.slane %v282, 4
        %v284 = vadd.f32 %v282, %v283
        %v285 = vrot.slane %v284, 2
        %v286 = vadd.f32 %v284, %v285
        %v287 = vrot.slane %v286, 1
        %v288 = vadd.f32 %v286, %v287
        %v289 = vmul.f32 %v233, 0.001953125
        %v290 = vmul.f32 %v240, 0.001953125
        %v291 = vmul.f32 %v281, 0.001953125
        %v292 = vmul.f32 %v288, 0.001953125
        %v293 = vmul.f32 %v289, %v289
        %v294 = vmul.f32 %v290, %v290
        %v295 = vsub.f32 %v291, %v293
        %v296 = vsub.f32 %v292, %v294
        %v297 = vmax.f32 %v295, 0.0
        %v298 = vmax.f32 %v296, 0.0
        %v299 = vadd.f32 %v297, 1e-05
        %v300 = vadd.f32 %v298, 1e-05
        %v301 = vrsqrt.pop %v299
        %v302 = vrsqrt.pop %v300
        %v303 = vld [vmem:[%s1] sm:$0x3]
        %v304 = vld [vmem:[%s1 + $0x2] sm:$0x3]
        %v305 = vld [vmem:[%s2] sm:$0x3]
        %v306 = vld [vmem:[%s2 + $0x2] sm:$0x3]
        %v307 = vmul.f32 %v303, %v301
        %v308 = vmul.f32 %v304, %v302
        %v309 = vmul.f32 %v289, %v307
        %v310 = vmul.f32 %v290, %v308
        %v311 = vsub.f32 %v305, %v309
        %v312 = vsub.f32 %v306, %v310
        %314 = vset.pattern.permute.xlu0 0
        %315 = vperm.xlu0 %314, %v307
        %v316 = vpop.permute.xlu0 %315
        %318 = vset.pattern.permute.xlu0 0
        %319 = vperm.xlu0 %318, %v308
        %v320 = vpop.permute.xlu0 %319
        %v322 = vunpack.c.l.s4 269488144
        %v323 = vunpack.c.0.s8 %v322
        %v324 = vlaneseq
        %v325 = vshrl.u32 %v324, 7
        %v326 = vsub.s32 %v323, %v325
        %v327 = vrot.slane %v316, %v326
        %v329 = vunpack.c.l.s4 269488144
        %v330 = vunpack.c.0.s8 %v329
        %v331 = vlaneseq
        %v332 = vshrl.u32 %v331, 7
        %v333 = vsub.s32 %v330, %v332
        %v334 = vrot.slane %v320, %v333
        %v337 = vmul.f32 %v192, %v327
        %v338 = vmul.f32 %v193, %v334
        %340 = vset.pattern.permute.xlu0 0
        %341 = vperm.xlu0 %340, %v311
        %v342 = vpop.permute.xlu0 %341
        %344 = vset.pattern.permute.xlu0 0
        %345 = vperm.xlu0 %344, %v312
        %v346 = vpop.permute.xlu0 %345
        %v348 = vunpack.c.l.s4 269488144
        %v349 = vunpack.c.0.s8 %v348
        %v350 = vlaneseq
        %v351 = vshrl.u32 %v350, 7
        %v352 = vsub.s32 %v349, %v351
        %v353 = vrot.slane %v342, %v352
        %v355 = vunpack.c.l.s4 269488144
        %v356 = vunpack.c.0.s8 %v355
        %v357 = vlaneseq
        %v358 = vshrl.u32 %v357, 7
        %v359 = vsub.s32 %v356, %v358
        %v360 = vrot.slane %v346, %v359
        %v363 = vadd.f32 %v337, %v353
        %v364 = vadd.f32 %v338, %v360
        %365 = vst [vmem:[%s189] sm:$0xf] %v363
        %366 = vst [vmem:[%s189 + $0x4] sm:$0xf] %v364
        %s367 = sand.u32 %s96, 1
        %s368 = scalar_lea.sflag [#allocation4], %s367
        %s369 = sand.u32 %s96, 1
        %s370 = smul.addr %s369, 8
        %s371 = scalar_lea.vmem [#allocation5], %s370
        // Predicated region
        $region37: #{tpu_custom_call.1} parent=31 // pred_check
          %p372 = pneg %p106
        $region38: #{tpu_custom_call.1} parent=31 // pred_check_branch
          %374 = sbr.rel (%p372) target = $region40
        $region39: #{tpu_custom_call.1} parent=31 // pred_region
          %s375 = smul.u32 2, %s20
          %s377 = ssub.s32 128, 128
          %378 = vsyncadd %s368, %s377
          %s379 = smul.addr %s375, 2
          %s380 = smul.addr %s379, 32
          %s381 = scalar_lea.hbm %s3, %s380
          %s382 = sshll.u32 %s371, 4
          %s383 = int_to_ptr.vmem [resolvable:$true] %s382
          %388 = dma.vmem_to_hbm [thread:$0]  %s383, 128, %s381, %s368, 64, 64, 4
        $region40: #{tpu_custom_call.1} parent=31 // pred_fallthru
          _
      $region32: #{tpu_custom_call.1} parent=5 // pred_fallthru
        _
      %p389 = scmp.le.s32.totalorder 2, %s15
      // Predicated region
      $region41: #{tpu_custom_call.1} parent=5 // pred_check
        %p390 = pneg %p389
      $region42: #{tpu_custom_call.1} parent=5 // pred_check_branch
        %392 = sbr.rel (%p390) target = $region44
      $region43: #{tpu_custom_call.1} parent=5 // pred_region
        %s393 = ssub.s32 %s15, 2
        // Predicated region
        $region45: #{tpu_custom_call.1} parent=43 // pred_check
          %p394 = pneg %p112
        $region46: #{tpu_custom_call.1} parent=43 // pred_check_branch
          %396 = sbr.rel (%p394) target = $region48
        $region47: #{tpu_custom_call.1} parent=43 // pred_region
          %s397 = sand.u32 %s97, 1
          %s398 = scalar_lea.sflag [#allocation4], %s397
          %s399 = sand.u32 %s97, 1
          %s400 = smul.addr %s399, 8
          %s401 = scalar_lea.vmem [#allocation5], %s400
          %402 = dma.done %s398, 128
        $region48: #{tpu_custom_call.1} parent=43 // pred_fallthru
          _
      $region44: #{tpu_custom_call.1} parent=5 // pred_fallthru
        _
    $region6: #{tpu_custom_call.1} parent=1 // loop_footer
      %s19 = sadd.s32 1, %s15
    $region7: #{tpu_custom_call.1} parent=1 // loop_footer_branch
      %14 = sbr.rel target = $region3
    $region8: #{tpu_custom_call.1} parent=1 // loop_exit
      _
    %403 = vsyncpa [#allocation3], 1
    %s404 = scalar_lea.sflag [#allocation3], 1
    %405 = vsyncpa %s404, 1
    %406 = vsyncpa [#allocation4], 1
    %s407 = scalar_lea.sflag [#allocation4], 1
    %408 = vsyncpa %s407, 1

</llo_original>
